<compile_context>
chip_gen: v7x
topology: tpu7x:2x2x1
jax: 0.10.0
libtpu: 0.0.40
codegen_flags: <defaults>
</compile_context>

<pallas_src>
import functools

import jax
import jax.numpy as jnp
from jax import lax
from jax.experimental import pallas as pl
from jax.experimental.pallas import tpu as pltpu


_LANES = 128          # vreg lane width
_SUBLANES = 8         # f32 sublanes per vreg
_LOW31 = 0x7FFFFFFF   # lower-31-bit mask of the monotone f32<->int32 key map
_BISECT_STEPS = 32    # one step per key bit -> exact order statistic


def _loss_kernel(x_ref, t_ref, thr_ref, idx_ref, out_ref, keys_ref, *, n, margin):
    """Whole forward pass in a single kernel invocation.

    x_ref   : (R, 128) f32 VMEM  logits[:, 1] slab, padded with +inf
    t_ref   : (R, 128) f32 VMEM  targets slab, padded with 0
    thr_ref : (1,)     f32 SMEM  threshold parameter
    idx_ref : (1,)     i32 SMEM  int(n * (1 - mean(targets)))  (PyTorch op order)
    out_ref : (1, 128) f32 VMEM  total loss, broadcast across lanes
    keys_ref: (R, 128) i32 VMEM  scratch: order-preserving integer keys
    """
    thr = thr_ref[0]
    idx = idx_ref[0]
    n_f = jnp.float32(n)

    xs = x_ref[...]
    ts = t_ref[...]
    valid = xs < jnp.float32(jnp.inf)            # padding is +inf
    mf = valid.astype(jnp.float32)
    xb = jnp.where(valid, xs, 0.0)

    # ----------------------- O(N) terms (one fused pass) -----------------------
    probs = jax.nn.sigmoid(xb)
    pred = (probs > thr).astype(jnp.float32)
    # F.binary_cross_entropy(hard_pred, targets) with 0/1 targets reduces to
    # 100 * mismatch-rate (PyTorch clamps log at -100).  Assumes 0/1 targets.
    mism = ts * (1.0 - pred) + (1.0 - ts) * pred
    threshold_loss = 100.0 * jnp.sum(mf * mism) / n_f

    # numerically stable BCE-with-logits
    bce_e = jnp.maximum(xb, 0.0) - xb * ts + jnp.log(1.0 + jnp.exp(-jnp.abs(xb)))
    bce_loss = jnp.sum(mf * bce_e) / n_f

    penalty = jnp.maximum(jnp.abs(thr - 0.5) - jnp.float32(margin), 0.0)

    # ------------- order statistic: 32-step bisection on int32 keys ------------
    # Monotone remap: key is a signed int32 whose order equals the float order.
    bits = pltpu.bitcast(xs, jnp.int32)
    keys_ref[...] = jnp.where(bits >= 0, bits, bits ^ jnp.int32(_LOW31))

    # smallest key k with count(keys <= k) >= idx + 1  ==  sorted(keys)[idx]
    # (+inf padding keys never perturb counts below any finite answer).
    tgt_f = (idx + jnp.int32(1)).astype(jnp.float32)   # exact for n < 2^24

    def bisect(_, carry):
        lo, hi = carry
        # overflow-safe floor((lo + hi) / 2) on signed int32
        mid = (lo >> 1) + (hi >> 1) + (lo & hi & jnp.int32(1))
        cnt = jnp.sum((keys_ref[...] <= mid).astype(jnp.float32))
        go_hi = cnt >= tgt_f
        return (jnp.where(go_hi, lo, mid + jnp.int32(1)),
                jnp.where(go_hi, mid, hi))

    lo0 = jnp.int32(jnp.iinfo(jnp.int32).min)
    hi0 = jnp.int32(jnp.iinfo(jnp.int32).max)
    opt_key, _ = lax.fori_loop(0, _BISECT_STEPS, bisect, (lo0, hi0))

    # key -> logit (inverse remap); kept vectorized to stay off the scalar path.
    key_v = jnp.full((1, _LANES), opt_key, dtype=jnp.int32)
    bits_v = jnp.where(key_v >= 0, key_v, key_v ^ jnp.int32(_LOW31))
    opt_prob_v = jax.nn.sigmoid(pltpu.bitcast(bits_v, jnp.float32))

    # idx == n (all-negative targets) may select a +inf padding logit; the
    # where-gate below makes that branch dead, exactly like the PyTorch module.
    tu_v = jnp.where(idx < jnp.int32(n), (thr - opt_prob_v) ** 2, 0.0)

    out_ref[...] = (bce_loss + 0.3 * threshold_loss + 0.1 * penalty
                    + 0.2 * tu_v).astype(jnp.float32)


def adaptive_threshold_loss(logits, targets, threshold, margin=0.1):
    """Pallas implementation of AdaptiveThresholdLoss.forward.

    Returns (total_loss of shape (1,), threshold as a DEVICE array).  The
    PyTorch module returns threshold.item(); the host sync is intentionally
    not reproduced so dispatch stays asynchronous.
    """
    n = int(logits.shape[0])
    x = logits[:, 1].astype(jnp.float32)
    t = targets.astype(jnp.float32)
    thr = threshold.astype(jnp.float32).reshape(1)

    # lane-dense (R, 128) slabs, R a multiple of 8; +inf padding keeps padded
    # logits out of the order statistic and is trivially masked for O(N) terms.
    rows = _SUBLANES * max(1, -(-n // (_SUBLANES * _LANES)))
    pad = rows * _LANES - n
    x_pad = jnp.pad(x, (0, pad), constant_values=jnp.inf).reshape(rows, _LANES)
    t_pad = jnp.pad(t, (0, pad)).reshape(rows, _LANES)

    # matches PyTorch: int(n * (1 - targets.float().mean())) in f32, truncated
    idx = jnp.floor(n * (1.0 - jnp.mean(t))).astype(jnp.int32).reshape(1)

    # generation-aware VMEM budget: x slab + t slab + key scratch + headroom,
    # capped at half the physical VMEM of the current chip (64 MiB on v7x).
    slab_bytes = rows * _LANES * 4
    try:
        vmem_cap = int(pltpu.get_tpu_info().vmem_capacity_bytes)
    except Exception:  # conservative fallback (v7x per-core size)
        vmem_cap = 64 * 2 ** 20
    vmem_limit = int(min(vmem_cap // 2, max(16 * 2 ** 20, 3 * slab_bytes + (2 << 20))))

    kernel = functools.partial(_loss_kernel, n=n, margin=float(margin))

    out = pl.pallas_call(
        kernel,
        out_shape=jax.ShapeDtypeStruct((1, _LANES), jnp.float32),
        in_specs=[
            pl.BlockSpec(memory_space=pltpu.MemorySpace.VMEM),   # x slab
            pl.BlockSpec(memory_space=pltpu.MemorySpace.VMEM),   # t slab
            pl.BlockSpec(memory_space=pltpu.MemorySpace.SMEM),   # threshold (1,)
            pl.BlockSpec(memory_space=pltpu.MemorySpace.SMEM),   # idx (1,)
        ],
        out_specs=pl.BlockSpec(memory_space=pltpu.MemorySpace.VMEM),
        scratch_shapes=[pltpu.VMEM((rows, _LANES), jnp.int32)],  # int32 keys
        compiler_params=pltpu.CompilerParams(vmem_limit_bytes=vmem_limit),
    )(x_pad, t_pad, thr, idx)

    total_loss = out[0, :1]
    return total_loss, threshold


def _reference_loss(logits, targets, threshold, margin=0.1):
    """Pure-JAX reference mirroring the PyTorch forward (uses jnp.sort)."""
    n = logits.shape[0]
    x = logits[:, 1].astype(jnp.float32)
    t = targets.astype(jnp.float32)
    thr = threshold.astype(jnp.float32)[0]
    probs = jax.nn.sigmoid(x)
    pred = (probs > thr).astype(jnp.float32)
    # PyTorch BCE clamps log terms at -100
    tl = jnp.mean(-(t * jnp.maximum(jnp.log(pred), -100.0)
                    + (1.0 - t) * jnp.maximum(jnp.log(1.0 - pred), -100.0)))
    bce = jnp.mean(jnp.maximum(x, 0.0) - x * t + jnp.log1p(jnp.exp(-jnp.abs(x))))
    probs_sorted = jnp.sort(probs)
    idx = int(jnp.floor(n * (1.0 - jnp.mean(t))))
    if idx < n:
        tu = (thr - probs_sorted[idx]) ** 2
    else:
        tu = jnp.float32(0.0)
    tp = jnp.maximum(jnp.abs(thr - 0.5) - margin, 0.0)
    return bce + 0.3 * tl + 0.2 * tu + 0.1 * tp


if __name__ == "__main__":
    key = jax.random.PRNGKey(0)
    k1, k2, k3, k4 = jax.random.split(key, 4)

    margin = 0.1
    threshold = jnp.array([0.5], dtype=jnp.float32)   # init_threshold=0.5

    # Small shapes consistent with the module: batches of binary-classifier logits.
    logits_s = jax.random.normal(k1, (8, 2), dtype=jnp.float32)
    targets_s = (jax.random.uniform(k2, (8,)) > 0.5).astype(jnp.float32)
    # Larger batch exercises padding / multi-row slab.
    logits_l = jax.random.normal(k3, (1536, 2), dtype=jnp.float32)
    targets_l = (jax.random.uniform(k4, (1536,)) > 0.5).astype(jnp.float32)
    # All-zero targets exercise the idx == n gate (threshold_update == 0).
    targets_z = jnp.zeros((8,), dtype=jnp.float32)

    cases = ((logits_s, targets_s), (logits_l, targets_l), (logits_s, targets_z))
    for lg, tg in cases:
        total_loss, thr_out = adaptive_threshold_loss(lg, tg, threshold, margin)
        total_loss = jax.block_until_ready(total_loss)
        ref = jax.block_until_ready(_reference_loss(lg, tg, threshold, margin))
        assert jnp.allclose(total_loss[0], ref, rtol=1e-5, atol=1e-5), (total_loss, ref)
        assert jnp.allclose(thr_out, threshold)

    print("KERNEL_OK")
</pallas_src>

<mosaic_0001>
module attributes {stable_mosaic.version = 11 : i64} {
  func.func @_loss_kernel(%arg0: memref<8x128xf32, #tpu.memory_space<vmem>>, %arg1: memref<8x128xf32, #tpu.memory_space<vmem>>, %arg2: memref<1xf32, #tpu.memory_space<smem>>, %arg3: memref<1xi32, #tpu.memory_space<smem>>, %arg4: memref<1x128xf32, #tpu.memory_space<vmem>>, %arg5: memref<8x128xi32, #tpu.memory_space<vmem>>) attributes {dimension_semantics = [], scalar_prefetch = 0 : i64, scratch_operands = 1 : i64, tpu.core_type = #tpu.core_type<tc>} {
    %c0 = arith.constant 0 : index
    %0 = memref.load %arg2[%c0] : memref<1xf32, #tpu.memory_space<smem>>
    %c0_0 = arith.constant 0 : index
    %1 = memref.load %arg3[%c0_0] : memref<1xi32, #tpu.memory_space<smem>>
    %c0_1 = arith.constant 0 : index
    %c0_2 = arith.constant 0 : index
    %2 = vector.load %arg0[%c0_1, %c0_2] : memref<8x128xf32, #tpu.memory_space<vmem>>, vector<8x128xf32>
    %c0_3 = arith.constant 0 : index
    %c0_4 = arith.constant 0 : index
    %3 = vector.load %arg1[%c0_3, %c0_4] : memref<8x128xf32, #tpu.memory_space<vmem>>, vector<8x128xf32>
    %cst = arith.constant 0x7F800000 : f32
    %4 = vector.broadcast %cst : f32 to vector<8x128xf32>
    %5 = arith.cmpf olt, %2, %4 : vector<8x128xf32>
    %6 = arith.extui %5 : vector<8x128xi1> to vector<8x128xi32>
    %7 = arith.sitofp %6 : vector<8x128xi32> to vector<8x128xf32>
    %cst_5 = arith.constant 0.000000e+00 : f32
    %8 = vector.broadcast %cst_5 : f32 to vector<8x128xf32>
    %9 = arith.select %5, %2, %8 : vector<8x128xi1>, vector<8x128xf32>
    %10 = arith.negf %9 : vector<8x128xf32>
    %11 = math.exp %10 : vector<8x128xf32>
    %cst_6 = arith.constant 1.000000e+00 : f32
    %12 = vector.broadcast %cst_6 : f32 to vector<8x128xf32>
    %13 = arith.addf %12, %11 : vector<8x128xf32>
    %14 = arith.divf %12, %13 : vector<8x128xf32>
    %15 = vector.broadcast %0 : f32 to vector<8x128xf32>
    %16 = arith.cmpf ogt, %14, %15 : vector<8x128xf32>
    %17 = arith.extui %16 : vector<8x128xi1> to vector<8x128xi32>
    %18 = arith.sitofp %17 : vector<8x128xi32> to vector<8x128xf32>
    %cst_7 = arith.constant 1.000000e+00 : f32
    %19 = vector.broadcast %cst_7 : f32 to vector<8x128xf32>
    %20 = arith.subf %19, %18 : vector<8x128xf32>
    %21 = arith.mulf %3, %20 : vector<8x128xf32>
    %cst_8 = arith.constant 1.000000e+00 : f32
    %22 = vector.broadcast %cst_8 : f32 to vector<8x128xf32>
    %23 = arith.subf %22, %3 : vector<8x128xf32>
    %24 = arith.mulf %23, %18 : vector<8x128xf32>
    %25 = arith.addf %21, %24 : vector<8x128xf32>
    %26 = arith.mulf %7, %25 : vector<8x128xf32>
    %27 = vector.shape_cast %26 : vector<8x128xf32> to vector<1x8x128xf32>
    %cst_9 = arith.constant dense<0.000000e+00> : vector<1xf32>
    %28 = vector.multi_reduction <add>, %27, %cst_9 [1, 2] : vector<1x8x128xf32> to vector<1xf32>
    %29 = vector.shape_cast %28 : vector<1xf32> to vector<1x1x1xf32>
    %30 = vector.extract %29[0, 0, 0] : f32 from vector<1x1x1xf32>
    %cst_10 = arith.constant 1.000000e+02 : f32
    %31 = arith.mulf %cst_10, %30 : f32
    %cst_11 = arith.constant 8.000000e+00 : f32
    %32 = arith.divf %31, %cst_11 : f32
    %cst_12 = arith.constant 0.000000e+00 : f32
    %33 = vector.broadcast %cst_12 : f32 to vector<8x128xf32>
    %34 = arith.maximumf %9, %33 : vector<8x128xf32>
    %35 = arith.mulf %9, %3 : vector<8x128xf32>
    %36 = arith.subf %34, %35 : vector<8x128xf32>
    %37 = math.absf %9 : vector<8x128xf32>
    %cst_13 = arith.constant 0.000000e+00 : f32
    %38 = vector.broadcast %cst_13 : f32 to vector<8x128xf32>
    %39 = arith.subf %38, %37 : vector<8x128xf32>
    %40 = math.exp %39 : vector<8x128xf32>
    %cst_14 = arith.constant 1.000000e+00 : f32
    %41 = vector.broadcast %cst_14 : f32 to vector<8x128xf32>
    %42 = arith.addf %41, %40 : vector<8x128xf32>
    %43 = math.log %42 : vector<8x128xf32>
    %44 = arith.addf %36, %43 : vector<8x128xf32>
    %45 = arith.mulf %7, %44 : vector<8x128xf32>
    %46 = vector.shape_cast %45 : vector<8x128xf32> to vector<1x8x128xf32>
    %cst_15 = arith.constant dense<0.000000e+00> : vector<1xf32>
    %47 = vector.multi_reduction <add>, %46, %cst_15 [1, 2] : vector<1x8x128xf32> to vector<1xf32>
    %48 = vector.shape_cast %47 : vector<1xf32> to vector<1x1x1xf32>
    %49 = vector.extract %48[0, 0, 0] : f32 from vector<1x1x1xf32>
    %cst_16 = arith.constant 8.000000e+00 : f32
    %50 = arith.divf %49, %cst_16 : f32
    %cst_17 = arith.constant 5.000000e-01 : f32
    %51 = arith.subf %0, %cst_17 : f32
    %52 = math.absf %51 : f32
    %cst_18 = arith.constant 1.000000e-01 : f32
    %53 = arith.subf %52, %cst_18 : f32
    %cst_19 = arith.constant 0.000000e+00 : f32
    %54 = arith.maximumf %53, %cst_19 : f32
    %55 = tpu.bitcast %2 : vector<8x128xf32> -> vector<8x128xi32>
    %c0_i32 = arith.constant 0 : i32
    %56 = vector.broadcast %c0_i32 : i32 to vector<8x128xi32>
    %57 = arith.cmpi sge, %55, %56 : vector<8x128xi32>
    %c2147483647_i32 = arith.constant 2147483647 : i32
    %58 = vector.broadcast %c2147483647_i32 : i32 to vector<8x128xi32>
    %59 = arith.xori %55, %58 : vector<8x128xi32>
    %60 = arith.select %57, %55, %59 : vector<8x128xi1>, vector<8x128xi32>
    %c0_20 = arith.constant 0 : index
    %c0_21 = arith.constant 0 : index
    %61 = vector.load %arg5[%c0_20, %c0_21] : memref<8x128xi32, #tpu.memory_space<vmem>>, vector<8x128xi32>
    tpu.vector_store %arg5[%c0_20, %c0_21], %60 {strides = array<i32>} : memref<8x128xi32, #tpu.memory_space<vmem>>, vector<8x128xi32>,
    %c1_i32 = arith.constant 1 : i32
    %62 = arith.addi %1, %c1_i32 : i32
    %63 = arith.sitofp %62 : i32 to f32
    %c-2147483648_i32 = arith.constant -2147483648 : i32
    %c2147483647_i32_22 = arith.constant 2147483647 : i32
    %c0_i32_23 = arith.constant 0 : i32
    %c32_i32 = arith.constant 32 : i32
    %64 = arith.addi %c0_i32_23, %c32_i32 : i32
    %c1_i32_24 = arith.constant 1 : i32
    %65:2 = scf.for %arg6 = %c0_i32_23 to %64 step %c1_i32_24 iter_args(%arg7 = %c-2147483648_i32, %arg8 = %c2147483647_i32_22) -> (i32, i32)  : i32 {
      %c1_i32_34 = arith.constant 1 : i32
      %93 = arith.shrsi %arg7, %c1_i32_34 : i32
      %c1_i32_35 = arith.constant 1 : i32
      %94 = arith.shrsi %arg8, %c1_i32_35 : i32
      %95 = arith.addi %93, %94 : i32
      %96 = arith.andi %arg7, %arg8 : i32
      %c1_i32_36 = arith.constant 1 : i32
      %97 = arith.andi %96, %c1_i32_36 : i32
      %98 = arith.addi %95, %97 : i32
      %c0_37 = arith.constant 0 : index
      %c0_38 = arith.constant 0 : index
      %99 = vector.load %arg5[%c0_37, %c0_38] : memref<8x128xi32, #tpu.memory_space<vmem>>, vector<8x128xi32>
      %100 = vector.broadcast %98 : i32 to vector<8x128xi32>
      %101 = arith.cmpi sle, %99, %100 : vector<8x128xi32>
      %102 = arith.extui %101 : vector<8x128xi1> to vector<8x128xi32>
      %103 = arith.sitofp %102 : vector<8x128xi32> to vector<8x128xf32>
      %104 = vector.shape_cast %103 : vector<8x128xf32> to vector<1x8x128xf32>
      %cst_39 = arith.constant dense<0.000000e+00> : vector<1xf32>
      %105 = vector.multi_reduction <add>, %104, %cst_39 [1, 2] : vector<1x8x128xf32> to vector<1xf32>
      %106 = vector.shape_cast %105 : vector<1xf32> to vector<1x1x1xf32>
      %107 = vector.extract %106[0, 0, 0] : f32 from vector<1x1x1xf32>
      %108 = arith.cmpf oge, %107, %63 : f32
      %c1_i32_40 = arith.constant 1 : i32
      %109 = arith.addi %98, %c1_i32_40 : i32
      %110 = arith.select %108, %arg7, %109 : i32
      %111 = arith.select %108, %98, %arg8 : i32
      scf.yield %110, %111 : i32, i32
    }
    %66 = vector.broadcast %65#0 : i32 to vector<1x128xi32>
    %c0_i32_25 = arith.constant 0 : i32
    %67 = vector.broadcast %c0_i32_25 : i32 to vector<1x128xi32>
    %68 = arith.cmpi sge, %66, %67 : vector<1x128xi32>
    %c2147483647_i32_26 = arith.constant 2147483647 : i32
    %69 = vector.broadcast %c2147483647_i32_26 : i32 to vector<1x128xi32>
    %70 = arith.xori %66, %69 : vector<1x128xi32>
    %71 = arith.select %68, %66, %70 : vector<1x128xi1>, vector<1x128xi32>
    %72 = tpu.bitcast %71 : vector<1x128xi32> -> vector<1x128xf32>
    %73 = arith.negf %72 : vector<1x128xf32>
    %74 = math.exp %73 : vector<1x128xf32>
    %cst_27 = arith.constant 1.000000e+00 : f32
    %75 = vector.broadcast %cst_27 : f32 to vector<1x128xf32>
    %76 = arith.addf %75, %74 : vector<1x128xf32>
    %77 = arith.divf %75, %76 : vector<1x128xf32>
    %c8_i32 = arith.constant 8 : i32
    %78 = arith.cmpi slt, %1, %c8_i32 : i32
    %79 = vector.broadcast %0 : f32 to vector<1x128xf32>
    %80 = arith.subf %79, %77 : vector<1x128xf32>
    %81 = arith.mulf %80, %80 : vector<1x128xf32>
    %cst_28 = arith.constant 0.000000e+00 : f32
    %82 = vector.broadcast %cst_28 : f32 to vector<1x128xf32>
    %83 = arith.select %78, %81, %82 : vector<1x128xf32>
    %cst_29 = arith.constant 3.000000e-01 : f32
    %84 = arith.mulf %cst_29, %32 : f32
    %85 = arith.addf %50, %84 : f32
    %cst_30 = arith.constant 1.000000e-01 : f32
    %86 = arith.mulf %cst_30, %54 : f32
    %87 = arith.addf %85, %86 : f32
    %cst_31 = arith.constant 2.000000e-01 : f32
    %88 = vector.broadcast %cst_31 : f32 to vector<1x128xf32>
    %89 = arith.mulf %88, %83 : vector<1x128xf32>
    %90 = vector.broadcast %87 : f32 to vector<1x128xf32>
    %91 = arith.addf %90, %89 : vector<1x128xf32>
    %c0_32 = arith.constant 0 : index
    %c0_33 = arith.constant 0 : index
    %92 = vector.load %arg4[%c0_32, %c0_33] : memref<1x128xf32, #tpu.memory_space<vmem>>, vector<1x128xf32>
    tpu.vector_store %arg4[%c0_32, %c0_33], %91 {strides = array<i32>} : memref<1x128xf32, #tpu.memory_space<vmem>>, vector<1x128xf32>,
    return
  }
}

</mosaic_0001>

<llo_original>
// kernel: tpu_custom_call.1
$region0: #{tpu_custom_call.1}
  #allocation0 [shape = 'u32[]', space=smem, size = 0x4, offset = 0x4, fixed_abs, tag = 'smem constant byte address 0x4 - core index']
  #allocation1 [shape = 'u32[144,128]{1,0:T(1,128)}', space=vmem, size = 0x12000, scoped, tag = 'internal scratch']
  #allocation2 [shape = 's32[8,128]{1,0:T(8,128)}', space=vmem, size = 0x1000, scoped, tag = 'scratch operand']
  #allocation3 [shape = 'f32[1]{0:T(128)S(6)}', space=smem, size = 0x200, scoped, tag = 'scoped memory for tpu_custom_call.1']
  #allocation4 [shape = 's32[1]{0:T(128)S(6)}', space=smem, size = 0x200, scoped, tag = 'scoped memory for tpu_custom_call.1']
  %s0 = inlined_call_operand.hbm [shape: f32[8,128], index: 0, kind: input, shape index: {}]
  %s1 = inlined_call_operand.vmem [shape: f32[8,128], index: 1, kind: input, shape index: {}]
  %s2 = inlined_call_operand.<no memory space> [shape: f32[1], index: 2, kind: input, shape index: {}]
  %s3 = inlined_call_operand.<no memory space> [shape: s32[1], index: 3, kind: input, shape index: {}]
  %s4 = inlined_call_operand.hbm [shape: f32[1,128], index: 4, kind: output, shape index: {}]
  %s5 = sld [smem:[#allocation0]]
  $region37: #{tpu_custom_call.1} parent=0
    _
  %s7 = ssub.s32 1, %s5
  %s8 = scalar_select 0, %s7, %s5
  %9 = sst [smem:[#allocation3]] %s2
  %10 = sst [smem:[#allocation4]] %s3
  $region1: #{tpu_custom_call.1} parent=0
    #allocation5 [shape = 'u8[4096]{0}', space=vmem, size = 0x1000, scoped, tag = 'input window, operand 0, single buffered']
    #allocation6 [shape = 's32[1]{0}', space=sflag, size = 0x4, scoped, tag = 'scoped memory for tpu_custom_call.1']
    #allocation7 [shape = 's32[1]{0}', space=sflag, size = 0x4, scoped, tag = 'scoped memory for tpu_custom_call.1']
    #allocation8 [shape = 'u8[512]{0}', space=vmem, size = 0x400, scoped, tag = 'output window, operand 0, single buffered']
    %11 = vsyncpa [#allocation6], 0
    %12 = vsyncpa [#allocation7], 0
    // Predicated region
    $region2: #{tpu_custom_call.1} parent=1 // pred_check
      _
    $region3: #{tpu_custom_call.1} parent=1 // pred_check_branch
      %14 = sbr.rel (0) target = $region5
    $region4: #{tpu_custom_call.1} parent=1 // pred_region
      %s16 = ssub.s32 128, 128
      %17 = vsyncadd [#allocation6], %s16
      %s19 = sshll.u32 [#allocation5], 4
      %s20 = int_to_ptr.vmem [resolvable:$true] %s19
      %22 = dma.hbm_to_vmem [thread:$0]  %s0, 128, %s20, [#allocation6]
    $region5: #{tpu_custom_call.1} parent=1 // pred_fallthru
      _
    // Predicated region
    $region6: #{tpu_custom_call.1} parent=1 // pred_check
      _
    $region7: #{tpu_custom_call.1} parent=1 // pred_check_branch
      %24 = sbr.rel (0) target = $region9
    $region8: #{tpu_custom_call.1} parent=1 // pred_region
      _
    $region9: #{tpu_custom_call.1} parent=1 // pred_fallthru
      _
    // Predicated region
    $region10: #{tpu_custom_call.1} parent=1 // pred_check
      _
    $region11: #{tpu_custom_call.1} parent=1 // pred_check_branch
      %26 = sbr.rel (0) target = $region13
    $region12: #{tpu_custom_call.1} parent=1 // pred_region
      _
    $region13: #{tpu_custom_call.1} parent=1 // pred_fallthru
      _
    // Predicated region
    $region14: #{tpu_custom_call.1} parent=1 // pred_check
      _
    $region15: #{tpu_custom_call.1} parent=1 // pred_check_branch
      %28 = sbr.rel (0) target = $region17
    $region16: #{tpu_custom_call.1} parent=1 // pred_region
      _
    $region17: #{tpu_custom_call.1} parent=1 // pred_fallthru
      _
    // Predicated region
    $region18: #{tpu_custom_call.1} parent=1 // pred_check
      _
    $region19: #{tpu_custom_call.1} parent=1 // pred_check_branch
      %30 = sbr.rel (0) target = $region21
    $region20: #{tpu_custom_call.1} parent=1 // pred_region
      %31 = dma.done [#allocation6], 128
    $region21: #{tpu_custom_call.1} parent=1 // pred_fallthru
      _
    %s32 = sld [smem:[#allocation3]]
    %s33 = sld [smem:[#allocation4]]
    %v34 = vld [vmem:[#allocation5] sm:$0xff]
    %v35 = vld [vmem:[%s1] sm:$0xff]
    %vm36 = vcmp.lt.f32.partialorder %v34, inf
    %v37 = vsel %vm36, 1, 0
    %v38 = vcvt.s32.f32 %v37
    %v39 = vsel %vm36, %v34, 0.0
    %v40 = vxor.u32 %v39, 2147483648
    %v41 = vmul.f32 %v40, 1.442695
    %v42 = vpow.pop %v41
    %v43 = vadd.f32 %v42, 1.0
    %v44 = vrcp.pop %v43
    %v45 = vmul.f32 1.0, %v44
    %v46 = vstv %s32
    %vm47 = vcmp.gt.f32.partialorder %v45, %v46
    %v48 = vsel %vm47, 1, 0
    %v49 = vcvt.s32.f32 %v48
    %v50 = vsub.f32 1.0, %v49
    %v51 = vmul.f32 %v35, %v50
    %v52 = vsub.f32 1.0, %v35
    %v53 = vmul.f32 %v52, %v49
    %v54 = vadd.f32 %v51, %v53
    %v55 = vmul.f32 %v38, %v54
    %56 = vadd.xlane.f32.xlu0 %v55
    %v57 = vpop.xlane.xlu0 %56
    %v58 = vrot.slane %v57, 4
    %v59 = vadd.f32 %v57, %v58
    %v60 = vrot.slane %v59, 2
    %v61 = vadd.f32 %v59, %v60
    %v62 = vrot.slane %v61, 1
    %v63 = vadd.f32 %v61, %v62
    %s64 = vtos %v63
    %s65 = smul.f32 %s64, 100.0
    %v66 = vrcp.pop 8.0
    %s67 = vtos %v66
    %s68 = smul.f32 %s65, %s67
    %v69 = vmax.f32 %v39, 0.0
    %v70 = vmul.f32 %v39, %v35
    %v71 = vsub.f32 %v69, %v70
    %v72 = vand.u32 2147483647, %v39
    %v73 = vsub.f32 0.0, %v72
    %v74 = vmul.f32 %v73, 1.442695
    %v75 = vpow.pop %v74
    %v76 = vadd.f32 %v75, 1.0
    %v77 = vlog2.pop %v76
    %v78 = vmul.f32 %v77, 0.6931472
    %v79 = vadd.f32 %v71, %v78
    %v80 = vmul.f32 %v38, %v79
    %81 = vadd.xlane.f32.xlu0 %v80
    %v82 = vpop.xlane.xlu0 %81
    %v83 = vrot.slane %v82, 4
    %v84 = vadd.f32 %v82, %v83
    %v85 = vrot.slane %v84, 2
    %v86 = vadd.f32 %v84, %v85
    %v87 = vrot.slane %v86, 1
    %v88 = vadd.f32 %v86, %v87
    %s89 = vtos %v88
    %v90 = vrcp.pop 8.0
    %s91 = vtos %v90
    %s92 = smul.f32 %s89, %s91
    %s93 = ssub.f32 %s32, 0.5
    %s94 = sand.u32 2147483647, %s93
    %s95 = ssub.f32 %s94, 0.1
    %s96 = smax.f32 %s95, 0.0
    %vm98 = vcmp.ge.s32.totalorder %v34, 0
    %v99 = vxor.u32 %v34, 2147483647
    %v100 = vsel %vm98, %v34, %v99
    %101 = vst [vmem:[#allocation2] sm:$0xff] %v100
    %s102 = sadd.s32 %s33, 1
    %s103 = scvt.s32.f32 %s102
    loop: start=0, step=1, limit=32
    $region22: #{tpu_custom_call.1} parent=1 // loop_pre_header
      _
    $region23: #{tpu_custom_call.1} parent=1 // loop_header
      %s105 = sphi 0, %s109
      %p106 = scmp.ge.s32.totalorder %s105, 32
      %s110 = sphi 2147483648, %s134
      %s111 = sphi 2147483647, %s135
    $region24: #{tpu_custom_call.1} parent=1 // loop_header_branch
      %108 = sbr.rel (%p106) target = $region28
    $region25: #{tpu_custom_call.1} parent=1 // loop_body
      %s112 = sshra.s32 %s110, 1
      %s113 = sshra.s32 %s111, 1
      %s114 = sadd.s32 %s112, %s113
      %s115 = sand.u32 %s110, %s111
      %s116 = sand.u32 %s115, 1
      %s117 = sadd.s32 %s114, %s116
      %v118 = vld [vmem:[#allocation2] sm:$0xff]
      %v119 = vstv %s117
      %vm120 = vcmp.le.s32.totalorder %v118, %v119
      %v121 = vsel %vm120, 1, 0
      %v122 = vcvt.s32.f32 %v121
      %123 = vadd.xlane.f32.xlu0 %v122
      %v124 = vpop.xlane.xlu0 %123
      %v125 = vrot.slane %v124, 4
      %v126 = vadd.f32 %v124, %v125
      %v127 = vrot.slane %v126, 2
      %v128 = vadd.f32 %v126, %v127
      %v129 = vrot.slane %v128, 1
      %v130 = vadd.f32 %v128, %v129
      %s131 = vtos %v130
      %p132 = scmp.ge.f32.partialorder %s131, %s103
      %s133 = sadd.s32 %s117, 1
      %s134 = scalar_select %p132, %s110, %s133
      %s135 = scalar_select %p132, %s117, %s111
    $region26: #{tpu_custom_call.1} parent=1 // loop_footer
      %s109 = sadd.s32 1, %s105
    $region27: #{tpu_custom_call.1} parent=1 // loop_footer_branch
      %104 = sbr.rel target = $region23
    $region28: #{tpu_custom_call.1} parent=1 // loop_exit
      _
    %v136 = vstv %s110
    %vm137 = vcmp.ge.s32.totalorder %v136, 0
    %v138 = vxor.u32 %v136, 2147483647
    %v139 = vsel %vm137, %v136, %v138
    %v141 = vxor.u32 %v139, 2147483648
    %v142 = vmul.f32 %v141, 1.442695
    %v143 = vpow.pop %v142
    %v144 = vadd.f32 %v143, 1.0
    %v145 = vrcp.pop %v144
    %v146 = vmul.f32 1.0, %v145
    %p147 = scmp.lt.s32.totalorder %s33, 8
    %v148 = vsub.f32 %v46, %v146
    %v149 = vmul.f32 %v148, %v148
    %s150 = scalar_select %p147, 1, 0
    %v151 = vstv %s150
    %vm152 = vcmp.eq.s32.totalorder %v151, 1
    %v153 = vsel %vm152, %v149, 0.0
    %s154 = smul.f32 %s68, 0.3
    %s155 = sadd.f32 %s92, %s154
    %s156 = smul.f32 %s96, 0.1
    %s157 = sadd.f32 %s155, %s156
    %v158 = vmul.f32 %v153, 0.2
    %v159 = vstv %s157
    %v160 = vadd.f32 %v159, %v158
    %161 = vst [vmem:[#allocation8] sm:$0x1] %v160
    // Predicated region
    $region29: #{tpu_custom_call.1} parent=1 // pred_check
      _
    $region30: #{tpu_custom_call.1} parent=1 // pred_check_branch
      %163 = sbr.rel (0) target = $region32
    $region31: #{tpu_custom_call.1} parent=1 // pred_region
      %s165 = ssub.s32 16, 16
      %166 = vsyncadd [#allocation7], %s165
      %s168 = sshll.u32 [#allocation8], 4
      %s169 = int_to_ptr.vmem [resolvable:$true] %s168
      %171 = dma.vmem_to_hbm [thread:$0]  %s169, 16, %s4, [#allocation7]
    $region32: #{tpu_custom_call.1} parent=1 // pred_fallthru
      _
    // Predicated region
    $region33: #{tpu_custom_call.1} parent=1 // pred_check
      _
    $region34: #{tpu_custom_call.1} parent=1 // pred_check_branch
      %173 = sbr.rel (0) target = $region36
    $region35: #{tpu_custom_call.1} parent=1 // pred_region
      %174 = dma.done [#allocation7], 16
    $region36: #{tpu_custom_call.1} parent=1 // pred_fallthru
      _
    %175 = vsyncpa [#allocation6], 1
    %176 = vsyncpa [#allocation7], 1

</llo_original>
